<compile_context>
chip_gen: v6e
topology: v6e:2x2x1
jax: 0.10.0
libtpu: 0.0.40
codegen_flags: <defaults>
</compile_context>

<pallas_src>
import functools

import jax
import jax.numpy as jnp
from jax.experimental import pallas as pl
from jax.experimental.pallas import tpu as pltpu


def _lm_criterion_kernel(*refs, n_rows, row_tile, tiles_per_core,
                         compute_entropy, has_weights):
    """Per-tile hot path.

    Inputs : x (row_tile, V) log-probs, tgt (row_tile, 1) i32,
             mask (row_tile, 1) f32, optional wmask (row_tile, 1) f32,
             col_ids (1, V) i32 (resident, fetched once per core).
    Outputs (resident per-core accumulators, reduced in the wrapper):
             nll_acc (row_tile, 1), mask_acc (row_tile, 1),
             optional ent_acc (row_tile, 1).
    """
    if has_weights:
        x_ref, tgt_ref, mask_ref, wmask_ref, col_ref = refs[:5]
        out_refs = refs[5:]
    else:
        x_ref, tgt_ref, mask_ref, col_ref = refs[:4]
        wmask_ref = None
        out_refs = refs[4:]
    if compute_entropy:
        nll_ref, msk_ref, ent_ref = out_refs
    else:
        nll_ref, msk_ref = out_refs
        ent_ref = None

    c = pl.program_id(0)   # core-parallel axis
    i = pl.program_id(1)   # sequential tile axis

    @pl.when(i == 0)
    def _init():
        nll_ref[...] = jnp.zeros_like(nll_ref)
        msk_ref[...] = jnp.zeros_like(msk_ref)
        if compute_entropy:
            ent_ref[...] = jnp.zeros_like(ent_ref)

    tr, v = x_ref.shape

    # Global row index of every row in this tile.  Tiles past the end of the
    # row range (index_map clamps them onto the last real tile) and the
    # out-of-bounds tail of the last partial tile are discarded AFTER the
    # per-row reductions, so unspecified OOB VMEM contents can never poison
    # the accumulators (where() picks 0 regardless of NaN/Inf on the dead lane).
    row0 = (c * tiles_per_core + i) * row_tile
    local = jax.lax.broadcasted_iota(jnp.int32, (tr, 1), 0)
    valid = (row0 + local) < n_rows                               # (tr, 1)

    x = x_ref[...].astype(jnp.float32)                            # (tr, v) raw
    tgt = tgt_ref[...]                                            # (tr, 1)
    mask = jnp.where(valid, mask_ref[...], 0.0)                   # (tr, 1)
    if has_weights:
        wmask = jnp.where(valid, wmask_ref[...], 0.0)             # mask*weights
    else:
        wmask = mask

    # gather(1, target) via one-hot masked per-row reduction (VPU + XLU)
    col = col_ref[...]                                            # (1, v) i32
    gathered = jnp.sum(jnp.where(col == tgt, x, 0.0), axis=-1, keepdims=True)
    gathered = jnp.where(valid, gathered, 0.0)

    nll_ref[...] += -gathered * wmask
    msk_ref[...] += mask
    if compute_entropy:
        ent_rows = jnp.sum(jnp.exp(x) * x, axis=-1, keepdims=True)
        ent_rows = jnp.where(valid, ent_rows, 0.0)
        ent_ref[...] += -ent_rows * mask


def _device_info():
    """Best-effort (vmem_budget_bytes, default_num_cores) for the local TPU."""
    vmem_cap = 64 << 20          # conservative: v7x per-TC VMEM
    kind = ""
    try:
        kind = (getattr(jax.devices()[0], "device_kind", "") or "").lower()
    except Exception:
        pass
    try:
        info = pltpu.get_tpu_info()
        vmem_cap = int(getattr(info, "vmem_capacity_bytes", vmem_cap))
    except Exception:
        pass
    # 2 TensorCores per chip on v4 / v5p / v7x-style parts; 1 on v5e / v6e.
    two_core = ("v7" in kind) or ("v4" in kind) or ("v5p" in kind)
    single_core = ("lite" in kind) or ("v5e" in kind) or ("v6e" in kind) or ("v6" in kind)
    num_cores = 2 if (two_core and not single_core) else 1
    budget = max(32 << 20, min(vmem_cap, 128 << 20) - (8 << 20))
    return budget, num_cores


def language_model_criterion(inp, target, weights=None, weight=0.0,
                             row_tile=None, num_cores=None):
    """JAX/Pallas equivalent of LanguageModelCriterion.forward (compute_prob=False).

    row_tile: rows of the flattened (R, V) view processed per grid step.
      None -> auto-pick the largest tile that (double-buffered) fits the
      device VMEM budget (512 f32 / 1024 bf16 rows cap).
    num_cores: leading "parallel" grid axis; None -> device default
      (1 on single-TC v5e/v6e, 2 on megacore parts).
    """
    # ---- glue: reshapes / mask construction, mirrors the PyTorch forward ----
    if target.ndim == 3:
        inp = inp.reshape(-1, inp.shape[2], inp.shape[3])
        target = target.reshape(-1, target.shape[2])
        if weights is not None:
            weights = weights.reshape(-1, weights.shape[2])
    seq_length = inp.shape[1]
    target = target[:, :seq_length]
    if weights is not None:
        weights = weights[:, :seq_length]

    mask = (target > 0).astype(jnp.float32)
    mask = jnp.concatenate(
        [jnp.ones((mask.shape[0], 1), jnp.float32), mask[:, :-1]], axis=1)

    m_rows, t_len, vocab = inp.shape
    n_rows = m_rows * t_len
    x = inp.reshape(n_rows, vocab)              # no wrapper-side cast; kernel upcasts
    tgt = target.reshape(n_rows, 1).astype(jnp.int32)
    mask_f = mask.reshape(n_rows, 1).astype(jnp.float32)
    col_ids = jnp.arange(vocab, dtype=jnp.int32).reshape(1, vocab)

    has_weights = weights is not None
    try:
        compute_entropy = float(weight) != 0.0   # static fast path when weight==0
    except TypeError:                            # traced weight -> always compute
        compute_entropy = True

    # ---- device-aware tiling (no padding of the big array) ----
    itemsize = jnp.dtype(x.dtype).itemsize
    align = 16 if itemsize < 4 else 8            # bf16 sublane packing

    budget, default_cores = _device_info()
    if num_cores is None:
        num_cores = default_cores
    num_cores = max(1, int(num_cores))

    def _aligned(rt):
        return max(align, ((int(rt) + align - 1) // align) * align)

    max_rows_aligned = _aligned(n_rows)
    # rows such that two in-flight x blocks + small streams fit the budget
    cap_rows = max(align, (budget - (4 << 20)) // (2 * vocab * itemsize))

    auto_tile = row_tile is None
    if auto_tile:
        row_tile = 512 if itemsize >= 4 else 1024
    row_tile = _aligned(min(int(row_tile), cap_rows, max_rows_aligned))

    total_tiles = pl.cdiv(n_rows, row_tile)

    # Auto-tiling only: prefer a nearby tile size that splits evenly across the
    # cores so no fully-masked dummy tile (= a wasted full-block HBM read) runs.
    if auto_tile and num_cores > 1 and total_tiles % num_cores != 0:
        for cand in range(row_tile, max(align - 1, row_tile - 8 * align), -align):
            if pl.cdiv(n_rows, cand) % num_cores == 0:
                row_tile = cand
                total_tiles = pl.cdiv(n_rows, cand)
                break

    num_cores = max(1, min(num_cores, total_tiles))
    tiles_per_core = pl.cdiv(total_tiles, num_cores)

    def row_block(c, i):
        # Clamp so that grid points past the last real tile just re-read the
        # last tile; their contribution is fully masked in-kernel.
        return (jnp.minimum(c * tiles_per_core + i, total_tiles - 1), 0)

    out_block = lambda c, i: (c, 0, 0)
    const_block = lambda c, i: (0, 0)

    in_specs = [
        pl.BlockSpec((row_tile, vocab), row_block),
        pl.BlockSpec((row_tile, 1), row_block),
        pl.BlockSpec((row_tile, 1), row_block),
    ]
    args = [x, tgt, mask_f]
    if has_weights:
        wmask = mask_f * weights.reshape(n_rows, 1).astype(jnp.float32)
        in_specs.append(pl.BlockSpec((row_tile, 1), row_block))
        args.append(wmask)
    # hoisted column ids: resident (1, V) block, fetched once per core
    in_specs.append(pl.BlockSpec((1, vocab), const_block))
    args.append(col_ids)

    n_out = 3 if compute_entropy else 2
    out_shape = tuple(
        jax.ShapeDtypeStruct((num_cores, row_tile, 1), jnp.float32)
        for _ in range(n_out))
    out_specs = tuple(
        pl.BlockSpec((None, row_tile, 1), out_block) for _ in range(n_out))

    kernel = functools.partial(
        _lm_criterion_kernel,
        n_rows=n_rows, row_tile=row_tile, tiles_per_core=tiles_per_core,
        compute_entropy=compute_entropy, has_weights=has_weights)

    # Double-buffered x block + headroom for the small streams / accumulators,
    # never above the device budget (v7x: 64 MiB per TC).
    x_block_bytes = row_tile * vocab * itemsize
    vmem_limit = int(min(budget, 2 * x_block_bytes + (8 << 20)))
    vmem_limit = max(vmem_limit, 16 << 20)

    acc = pl.pallas_call(
        kernel,
        out_shape=out_shape,
        grid_spec=pltpu.PrefetchScalarGridSpec(
            num_scalar_prefetch=0,
            grid=(num_cores, tiles_per_core),
            in_specs=in_specs,
            out_specs=out_specs,
        ),
        compiler_params=pltpu.CompilerParams(
            dimension_semantics=("parallel", "arbitrary"),
            vmem_limit_bytes=vmem_limit,
        ),
    )(*args)

    nll_sum = jnp.sum(acc[0])
    mask_sum = jnp.sum(acc[1])
    loss = nll_sum / mask_sum
    if compute_entropy:
        ent_sum = jnp.sum(acc[2])
        loss = loss + weight * (ent_sum / mask_sum)
    # TODO(synk): compute_prob=True branch (per-sequence averaged output) is not
    # implemented; only the default scalar-loss path is.
    return loss


def _reference(inp, target, weights=None, weight=0.0):
    """Pure-JAX reference mirroring the PyTorch forward (compute_prob=False)."""
    inp3 = inp.reshape(-1, inp.shape[2], inp.shape[3])
    tgt2 = target.reshape(-1, target.shape[2])
    t_len = inp3.shape[1]
    tgt2 = tgt2[:, :t_len]
    mask = (tgt2 > 0).astype(jnp.float32)
    mask = jnp.concatenate(
        [jnp.ones((mask.shape[0], 1), jnp.float32), mask[:, :-1]], axis=1)
    x = inp3.reshape(-1, inp3.shape[2]).astype(jnp.float32)
    t = tgt2.reshape(-1)
    m = mask.reshape(-1)
    out = -x[jnp.arange(x.shape[0]), t] * m
    if weights is not None:
        out = out * weights.reshape(-1).astype(jnp.float32)
    output = out.sum() / m.sum()
    ent = -(jnp.exp(x) * x).sum(-1) * m
    ent = ent.sum() / m.sum()
    return output + weight * ent


if __name__ == "__main__":
    key = jax.random.PRNGKey(0)
    k1, k2, k3 = jax.random.split(key, 3)

    # small shapes consistent with the module's (B, N, T, V) convention
    B, N, T, V = 2, 3, 8, 512
    logits = jax.random.normal(k1, (B, N, T, V), dtype=jnp.float32)
    log_probs = jax.nn.log_softmax(logits, axis=-1)
    target = jax.random.randint(k2, (B, N, T), 0, V, dtype=jnp.int32)
    target = target.at[:, :, -2:].set(0)       # force padding-like zeros
    weights = jax.random.uniform(k3, (B, N, T), dtype=jnp.float32)

    # 1) entropy-regularized path, no per-token weights, auto tiling
    loss1 = jax.block_until_ready(
        language_model_criterion(log_probs, target, weight=0.1))
    ref1 = _reference(log_probs, target, weight=0.1)
    assert jnp.allclose(loss1, ref1, rtol=1e-4, atol=1e-5), (loss1, ref1)

    # 2) weight == 0 fast path with per-token weights
    loss2 = jax.block_until_ready(
        language_model_criterion(log_probs, target, weights=weights, weight=0.0))
    ref2 = _reference(log_probs, target, weights=weights, weight=0.0)
    assert jnp.allclose(loss2, ref2, rtol=1e-4, atol=1e-5), (loss2, ref2)

    # 3) explicit non-divisible tiling (partial last tile; on 2-core devices the
    #    clamped dummy-tile safety path is exercised too)
    loss3 = jax.block_until_ready(
        language_model_criterion(log_probs, target, weights=weights,
                                 weight=0.25, row_tile=16))
    ref3 = _reference(log_probs, target, weights=weights, weight=0.25)
    assert jnp.allclose(loss3, ref3, rtol=1e-4, atol=1e-5), (loss3, ref3)

    # 4) bf16 log-probs streamed from HBM (half the bytes), kernel upcasts
    log_probs_bf16 = log_probs.astype(jnp.bfloat16)
    loss4 = jax.block_until_ready(
        language_model_criterion(log_probs_bf16, target, weight=0.1))
    ref4 = _reference(log_probs_bf16, target, weight=0.1)
    assert jnp.allclose(loss4, ref4, rtol=1e-3, atol=1e-4), (loss4, ref4)

    print("KERNEL_OK")
</pallas_src>

<mosaic_0001>
module attributes {stable_mosaic.version = 11 : i64} {
  func.func @_lm_criterion_kernel(%arg0: i32, %arg1: i32, %arg2: memref<48x512xf32, #tpu.memory_space<vmem>>, %arg3: memref<48x1xi32, #tpu.memory_space<vmem>>, %arg4: memref<48x1xf32, #tpu.memory_space<vmem>>, %arg5: memref<1x512xi32, #tpu.memory_space<vmem>>, %arg6: memref<1x48x1xf32, #tpu.memory_space<vmem>>, %arg7: memref<1x48x1xf32, #tpu.memory_space<vmem>>, %arg8: memref<1x48x1xf32, #tpu.memory_space<vmem>>) attributes {dimension_semantics = [#tpu.dimension_semantics<parallel>, #tpu.dimension_semantics<arbitrary>], iteration_bounds = array<i64: 1, 1>, scalar_prefetch = 0 : i64, scratch_operands = 0 : i64, tpu.core_type = #tpu.core_type<tc>, window_params = [{transform_indices = @transform_0, window_bounds = array<i64: 48, 512>}, {transform_indices = @transform_1, window_bounds = array<i64: 48, 1>}, {transform_indices = @transform_2, window_bounds = array<i64: 48, 1>}, {pipeline_mode = #tpu.pipeline_mode<synchronous>, transform_indices = @transform_3, window_bounds = array<i64: 1, 512>}, {transform_indices = @transform_4, window_bounds = array<i64: 1, 48, 1>}, {transform_indices = @transform_5, window_bounds = array<i64: 1, 48, 1>}, {transform_indices = @transform_6, window_bounds = array<i64: 1, 48, 1>}]} {
    %c0_i32 = arith.constant 0 : i32
    %0 = arith.cmpi eq, %arg1, %c0_i32 : i32
    %1 = arith.extui %0 : i1 to i32
    %c0_i32_0 = arith.constant 0 : i32
    %2 = arith.cmpi ne, %1, %c0_i32_0 : i32
    scf.if %2 {
      %cst_34 = arith.constant 0.000000e+00 : f32
      %56 = vector.broadcast %cst_34 : f32 to vector<48x1xf32>
      %c0_35 = arith.constant 0 : index
      %c0_36 = arith.constant 0 : index
      %c0_37 = arith.constant 0 : index
      %57 = vector.load %arg6[%c0_35, %c0_36, %c0_37] : memref<1x48x1xf32, #tpu.memory_space<vmem>>, vector<1x48x1xf32>
      %58 = vector.shape_cast %57 : vector<1x48x1xf32> to vector<48x1xf32>
      %59 = vector.shape_cast %56 : vector<48x1xf32> to vector<1x48x1xf32>
      tpu.vector_store %arg6[%c0_35, %c0_36, %c0_37], %59 {strides = array<i32>} : memref<1x48x1xf32, #tpu.memory_space<vmem>>, vector<1x48x1xf32>,
      %cst_38 = arith.constant 0.000000e+00 : f32
      %60 = vector.broadcast %cst_38 : f32 to vector<48x1xf32>
      %c0_39 = arith.constant 0 : index
      %c0_40 = arith.constant 0 : index
      %c0_41 = arith.constant 0 : index
      %61 = vector.load %arg7[%c0_39, %c0_40, %c0_41] : memref<1x48x1xf32, #tpu.memory_space<vmem>>, vector<1x48x1xf32>
      %62 = vector.shape_cast %61 : vector<1x48x1xf32> to vector<48x1xf32>
      %63 = vector.shape_cast %60 : vector<48x1xf32> to vector<1x48x1xf32>
      tpu.vector_store %arg7[%c0_39, %c0_40, %c0_41], %63 {strides = array<i32>} : memref<1x48x1xf32, #tpu.memory_space<vmem>>, vector<1x48x1xf32>,
      %cst_42 = arith.constant 0.000000e+00 : f32
      %64 = vector.broadcast %cst_42 : f32 to vector<48x1xf32>
      %c0_43 = arith.constant 0 : index
      %c0_44 = arith.constant 0 : index
      %c0_45 = arith.constant 0 : index
      %65 = vector.load %arg8[%c0_43, %c0_44, %c0_45] : memref<1x48x1xf32, #tpu.memory_space<vmem>>, vector<1x48x1xf32>
      %66 = vector.shape_cast %65 : vector<1x48x1xf32> to vector<48x1xf32>
      %67 = vector.shape_cast %64 : vector<48x1xf32> to vector<1x48x1xf32>
      tpu.vector_store %arg8[%c0_43, %c0_44, %c0_45], %67 {strides = array<i32>} : memref<1x48x1xf32, #tpu.memory_space<vmem>>, vector<1x48x1xf32>,
    } else {
    }
    %c1_i32 = arith.constant 1 : i32
    %3 = arith.muli %arg0, %c1_i32 : i32
    %4 = arith.addi %3, %arg1 : i32
    %c48_i32 = arith.constant 48 : i32
    %5 = arith.muli %4, %c48_i32 : i32
    %6 = tpu.iota {dimensions = array<i32: 0>} : vector<48x1xi32>
    %7 = vector.broadcast %5 : i32 to vector<48x1xi32>
    %8 = arith.addi %7, %6 : vector<48x1xi32>
    %c48_i32_1 = arith.constant 48 : i32
    %9 = vector.broadcast %c48_i32_1 : i32 to vector<48x1xi32>
    %10 = arith.cmpi slt, %8, %9 : vector<48x1xi32>
    %c0 = arith.constant 0 : index
    %c0_2 = arith.constant 0 : index
    %11 = vector.load %arg2[%c0, %c0_2] : memref<48x512xf32, #tpu.memory_space<vmem>>, vector<48x512xf32>
    %c0_3 = arith.constant 0 : index
    %c0_4 = arith.constant 0 : index
    %12 = vector.load %arg3[%c0_3, %c0_4] : memref<48x1xi32, #tpu.memory_space<vmem>>, vector<48x1xi32>
    %c0_5 = arith.constant 0 : index
    %c0_6 = arith.constant 0 : index
    %13 = vector.load %arg4[%c0_5, %c0_6] : memref<48x1xf32, #tpu.memory_space<vmem>>, vector<48x1xf32>
    %cst = arith.constant 0.000000e+00 : f32
    %14 = vector.broadcast %cst : f32 to vector<48x1xf32>
    %15 = arith.select %10, %13, %14 : vector<48x1xi1>, vector<48x1xf32>
    %c0_7 = arith.constant 0 : index
    %c0_8 = arith.constant 0 : index
    %16 = vector.load %arg5[%c0_7, %c0_8] : memref<1x512xi32, #tpu.memory_space<vmem>>, vector<1x512xi32>
    %17 = vector.broadcast %16 : vector<1x512xi32> to vector<48x512xi32>
    %18 = vector.broadcast %12 : vector<48x1xi32> to vector<48x512xi32>
    %19 = arith.cmpi eq, %17, %18 : vector<48x512xi32>
    %cst_9 = arith.constant 0.000000e+00 : f32
    %20 = vector.broadcast %cst_9 : f32 to vector<48x512xf32>
    %21 = arith.select %19, %11, %20 : vector<48x512xi1>, vector<48x512xf32>
    %cst_10 = arith.constant dense<0.000000e+00> : vector<48xf32>
    %22 = vector.multi_reduction <add>, %21, %cst_10 [1] : vector<48x512xf32> to vector<48xf32>
    %23 = vector.shape_cast %22 : vector<48xf32> to vector<48x1xf32>
    %cst_11 = arith.constant 0.000000e+00 : f32
    %24 = vector.broadcast %cst_11 : f32 to vector<48x1xf32>
    %25 = arith.select %10, %23, %24 : vector<48x1xi1>, vector<48x1xf32>
    %c0_12 = arith.constant 0 : index
    %c0_13 = arith.constant 0 : index
    %c0_14 = arith.constant 0 : index
    %26 = vector.load %arg6[%c0_12, %c0_13, %c0_14] : memref<1x48x1xf32, #tpu.memory_space<vmem>>, vector<1x48x1xf32>
    %27 = vector.shape_cast %26 : vector<1x48x1xf32> to vector<48x1xf32>
    %cst_15 = arith.constant 0.000000e+00 : f32
    %28 = vector.broadcast %cst_15 : f32 to vector<48x1xf32>
    %29 = arith.subf %28, %25 : vector<48x1xf32>
    %30 = arith.mulf %29, %15 : vector<48x1xf32>
    %31 = arith.addf %27, %30 : vector<48x1xf32>
    %c0_16 = arith.constant 0 : index
    %c0_17 = arith.constant 0 : index
    %c0_18 = arith.constant 0 : index
    %32 = vector.load %arg6[%c0_16, %c0_17, %c0_18] : memref<1x48x1xf32, #tpu.memory_space<vmem>>, vector<1x48x1xf32>
    %33 = vector.shape_cast %32 : vector<1x48x1xf32> to vector<48x1xf32>
    %34 = vector.shape_cast %31 : vector<48x1xf32> to vector<1x48x1xf32>
    tpu.vector_store %arg6[%c0_16, %c0_17, %c0_18], %34 {strides = array<i32>} : memref<1x48x1xf32, #tpu.memory_space<vmem>>, vector<1x48x1xf32>,
    %c0_19 = arith.constant 0 : index
    %c0_20 = arith.constant 0 : index
    %c0_21 = arith.constant 0 : index
    %35 = vector.load %arg7[%c0_19, %c0_20, %c0_21] : memref<1x48x1xf32, #tpu.memory_space<vmem>>, vector<1x48x1xf32>
    %36 = vector.shape_cast %35 : vector<1x48x1xf32> to vector<48x1xf32>
    %37 = arith.addf %36, %15 : vector<48x1xf32>
    %c0_22 = arith.constant 0 : index
    %c0_23 = arith.constant 0 : index
    %c0_24 = arith.constant 0 : index
    %38 = vector.load %arg7[%c0_22, %c0_23, %c0_24] : memref<1x48x1xf32, #tpu.memory_space<vmem>>, vector<1x48x1xf32>
    %39 = vector.shape_cast %38 : vector<1x48x1xf32> to vector<48x1xf32>
    %40 = vector.shape_cast %37 : vector<48x1xf32> to vector<1x48x1xf32>
    tpu.vector_store %arg7[%c0_22, %c0_23, %c0_24], %40 {strides = array<i32>} : memref<1x48x1xf32, #tpu.memory_space<vmem>>, vector<1x48x1xf32>,
    %41 = math.exp %11 : vector<48x512xf32>
    %42 = arith.mulf %41, %11 : vector<48x512xf32>
    %cst_25 = arith.constant dense<0.000000e+00> : vector<48xf32>
    %43 = vector.multi_reduction <add>, %42, %cst_25 [1] : vector<48x512xf32> to vector<48xf32>
    %44 = vector.shape_cast %43 : vector<48xf32> to vector<48x1xf32>
    %cst_26 = arith.constant 0.000000e+00 : f32
    %45 = vector.broadcast %cst_26 : f32 to vector<48x1xf32>
    %46 = arith.select %10, %44, %45 : vector<48x1xi1>, vector<48x1xf32>
    %c0_27 = arith.constant 0 : index
    %c0_28 = arith.constant 0 : index
    %c0_29 = arith.constant 0 : index
    %47 = vector.load %arg8[%c0_27, %c0_28, %c0_29] : memref<1x48x1xf32, #tpu.memory_space<vmem>>, vector<1x48x1xf32>
    %48 = vector.shape_cast %47 : vector<1x48x1xf32> to vector<48x1xf32>
    %cst_30 = arith.constant 0.000000e+00 : f32
    %49 = vector.broadcast %cst_30 : f32 to vector<48x1xf32>
    %50 = arith.subf %49, %46 : vector<48x1xf32>
    %51 = arith.mulf %50, %15 : vector<48x1xf32>
    %52 = arith.addf %48, %51 : vector<48x1xf32>
    %c0_31 = arith.constant 0 : index
    %c0_32 = arith.constant 0 : index
    %c0_33 = arith.constant 0 : index
    %53 = vector.load %arg8[%c0_31, %c0_32, %c0_33] : memref<1x48x1xf32, #tpu.memory_space<vmem>>, vector<1x48x1xf32>
    %54 = vector.shape_cast %53 : vector<1x48x1xf32> to vector<48x1xf32>
    %55 = vector.shape_cast %52 : vector<48x1xf32> to vector<1x48x1xf32>
    tpu.vector_store %arg8[%c0_31, %c0_32, %c0_33], %55 {strides = array<i32>} : memref<1x48x1xf32, #tpu.memory_space<vmem>>, vector<1x48x1xf32>,
    return
  }
  func.func @transform_0(%arg0: i32, %arg1: i32) -> (i32, i32) {
    %c1_i32 = arith.constant 1 : i32
    %0 = arith.muli %arg0, %c1_i32 : i32
    %1 = arith.addi %0, %arg1 : i32
    %c0_i32 = arith.constant 0 : i32
    %2 = arith.minsi %1, %c0_i32 : i32
    %c0_i32_0 = arith.constant 0 : i32
    %c0_i32_1 = arith.constant 0 : i32
    return %2, %c0_i32_0 : i32, i32
  }
  func.func @transform_1(%arg0: i32, %arg1: i32) -> (i32, i32) {
    %c1_i32 = arith.constant 1 : i32
    %0 = arith.muli %arg0, %c1_i32 : i32
    %1 = arith.addi %0, %arg1 : i32
    %c0_i32 = arith.constant 0 : i32
    %2 = arith.minsi %1, %c0_i32 : i32
    %c0_i32_0 = arith.constant 0 : i32
    %c0_i32_1 = arith.constant 0 : i32
    return %2, %c0_i32_0 : i32, i32
  }
  func.func @transform_2(%arg0: i32, %arg1: i32) -> (i32, i32) {
    %c1_i32 = arith.constant 1 : i32
    %0 = arith.muli %arg0, %c1_i32 : i32
    %1 = arith.addi %0, %arg1 : i32
    %c0_i32 = arith.constant 0 : i32
    %2 = arith.minsi %1, %c0_i32 : i32
    %c0_i32_0 = arith.constant 0 : i32
    %c0_i32_1 = arith.constant 0 : i32
    return %2, %c0_i32_0 : i32, i32
  }
  func.func @transform_3(%arg0: i32, %arg1: i32) -> (i32, i32) {
    %c0_i32 = arith.constant 0 : i32
    %c0_i32_0 = arith.constant 0 : i32
    %c0_i32_1 = arith.constant 0 : i32
    return %c0_i32, %c0_i32_0 : i32, i32
  }
  func.func @transform_4(%arg0: i32, %arg1: i32) -> (i32, i32, i32) {
    %c0_i32 = arith.constant 0 : i32
    %c0_i32_0 = arith.constant 0 : i32
    %c0_i32_1 = arith.constant 0 : i32
    return %arg0, %c0_i32, %c0_i32_0 : i32, i32, i32
  }
  func.func @transform_5(%arg0: i32, %arg1: i32) -> (i32, i32, i32) {
    %c0_i32 = arith.constant 0 : i32
    %c0_i32_0 = arith.constant 0 : i32
    %c0_i32_1 = arith.constant 0 : i32
    return %arg0, %c0_i32, %c0_i32_0 : i32, i32, i32
  }
  func.func @transform_6(%arg0: i32, %arg1: i32) -> (i32, i32, i32) {
    %c0_i32 = arith.constant 0 : i32
    %c0_i32_0 = arith.constant 0 : i32
    %c0_i32_1 = arith.constant 0 : i32
    return %arg0, %c0_i32, %c0_i32_0 : i32, i32, i32
  }
}

</mosaic_0001>

<llo_original>
// kernel: tpu_custom_call.1
$region0: #{tpu_custom_call.1}
  #allocation0 [shape = 'u32[]', space=smem, size = 0x4, offset = 0x4, fixed_abs, tag = 'smem constant byte address 0x4 - core index']
  #allocation1 [shape = 'u32[144,128]{1,0:T(1,128)}', space=vmem, size = 0x12000, scoped, tag = 'internal scratch']
  %s0 = inlined_call_operand.hbm [shape: f32[48,512], index: 0, kind: input, shape index: {}]
  %s1 = inlined_call_operand.vmem [shape: s32[48,1], index: 1, kind: input, shape index: {}]
  %s2 = inlined_call_operand.vmem [shape: f32[48,1], index: 2, kind: input, shape index: {}]
  %s3 = inlined_call_operand.vmem [shape: s32[1,512], index: 3, kind: input, shape index: {}]
  %s4 = inlined_call_operand.vmem [shape: f32[1,48,1], index: 4, kind: output, shape index: {0}]
  %s5 = inlined_call_operand.vmem [shape: f32[1,48,1], index: 5, kind: output, shape index: {1}]
  %s6 = inlined_call_operand.vmem [shape: f32[1,48,1], index: 6, kind: output, shape index: {2}]
  %7 = xla_tuple %s4, %s5, %s6
  %s8 = sld [smem:[#allocation0]]
  $region50: #{tpu_custom_call.1} parent=0
    _
  %s10 = ssub.s32 1, %s8
  %s11 = scalar_select 0, %s10, %s8
  $region1: #{tpu_custom_call.1} parent=0
    #allocation2 [shape = 'u8[98304]{0}', space=vmem, size = 0x18000, scoped, tag = 'input window, operand 0, single buffered']
    #allocation3 [shape = 's32[1]{0}', space=sflag, size = 0x4, scoped, tag = 'scoped memory for tpu_custom_call.1']
    %12 = vsyncpa [#allocation3], 0
    // Predicated region
    $region2: #{tpu_custom_call.1} parent=1 // pred_check
      _
    $region3: #{tpu_custom_call.1} parent=1 // pred_check_branch
      %14 = sbr.rel (0) target = $region5
    $region4: #{tpu_custom_call.1} parent=1 // pred_region
      %s15 = sadd.s32 0, 0
      %p16 = scmp.lt.s32.totalorder %s15, 0
      %s17 = scalar_select %p16, %s15, 0
      %s18 = smul.u32 6, %s17
      %s20 = ssub.s32 3072, 3072
      %21 = vsyncadd [#allocation3], %s20
      %s22 = smul.addr %s18, 4
      %s23 = smul.addr %s22, 128
      %s24 = scalar_lea.hbm %s0, %s23
      %s25 = sshll.u32 [#allocation2], 4
      %s26 = int_to_ptr.vmem [resolvable:$true] %s25
      %31 = dma.hbm_to_vmem [thread:$0]  %s24, 3072, %s26, [#allocation3], 512, 512, 32
    $region5: #{tpu_custom_call.1} parent=1 // pred_fallthru
      _
    // Predicated region
    $region6: #{tpu_custom_call.1} parent=1 // pred_check
      _
    $region7: #{tpu_custom_call.1} parent=1 // pred_check_branch
      %33 = sbr.rel (0) target = $region9
    $region8: #{tpu_custom_call.1} parent=1 // pred_region
      %s34 = sadd.s32 0, 0
      %p35 = scmp.lt.s32.totalorder %s34, 0
      %s36 = scalar_select %p35, %s34, 0
      %s37 = smul.u32 6, %s36
      %p38 = scmp.lt.s32.totalorder %s37, 5
      %s39 = scalar_select %p38, %s37, 5
      %s40 = smul.addr %s39, 8
      %s41 = scalar_lea.vmem %s1, %s40
      %s42 = sadd.s32 0, 0
      %p43 = scmp.lt.s32.totalorder %s42, 0
      %s44 = scalar_select %p43, %s42, 0
      %s45 = smul.u32 6, %s44
    $region9: #{tpu_custom_call.1} parent=1 // pred_fallthru
      _
    // Predicated region
    $region10: #{tpu_custom_call.1} parent=1 // pred_check
      _
    $region11: #{tpu_custom_call.1} parent=1 // pred_check_branch
      %47 = sbr.rel (0) target = $region13
    $region12: #{tpu_custom_call.1} parent=1 // pred_region
      %s48 = sadd.s32 0, 0
      %p49 = scmp.lt.s32.totalorder %s48, 0
      %s50 = scalar_select %p49, %s48, 0
      %s51 = smul.u32 6, %s50
      %p52 = scmp.lt.s32.totalorder %s51, 5
      %s53 = scalar_select %p52, %s51, 5
      %s54 = smul.addr %s53, 8
      %s55 = scalar_lea.vmem %s2, %s54
      %s56 = sadd.s32 0, 0
      %p57 = scmp.lt.s32.totalorder %s56, 0
      %s58 = scalar_select %p57, %s56, 0
      %s59 = smul.u32 6, %s58
    $region13: #{tpu_custom_call.1} parent=1 // pred_fallthru
      _
    // Predicated region
    $region14: #{tpu_custom_call.1} parent=1 // pred_check
      _
    $region15: #{tpu_custom_call.1} parent=1 // pred_check_branch
      %61 = sbr.rel (0) target = $region17
    $region16: #{tpu_custom_call.1} parent=1 // pred_region
      _
    $region17: #{tpu_custom_call.1} parent=1 // pred_fallthru
      _
    // Predicated region
    $region18: #{tpu_custom_call.1} parent=1 // pred_check
      _
    $region19: #{tpu_custom_call.1} parent=1 // pred_check_branch
      %63 = sbr.rel (0) target = $region21
    $region20: #{tpu_custom_call.1} parent=1 // pred_region
      %64 = dma.done [#allocation3], 3072
    $region21: #{tpu_custom_call.1} parent=1 // pred_fallthru
      _
    %s65 = sadd.s32 0, 0
    %p66 = scmp.lt.s32.totalorder %s65, 0
    %s67 = scalar_select %p66, %s65, 0
    %s68 = smul.u32 6, %s67
    %p69 = scmp.lt.s32.totalorder %s68, 5
    %s70 = scalar_select %p69, %s68, 5
    %s71 = smul.addr %s70, 8
    %s72 = scalar_lea.vmem %s1, %s71
    %s73 = sadd.s32 0, 0
    %p74 = scmp.lt.s32.totalorder %s73, 0
    %s75 = scalar_select %p74, %s73, 0
    %s76 = smul.u32 6, %s75
    %p77 = scmp.lt.s32.totalorder %s76, 5
    %s78 = scalar_select %p77, %s76, 5
    %s79 = smul.addr %s78, 8
    %s80 = scalar_lea.vmem %s2, %s79
    %s81 = sadd.s32 0, 0
    %p82 = scmp.lt.s32.totalorder %s81, 0
    %s83 = scalar_select %p82, %s81, 0
    %s84 = smul.u32 6, %s83
    %s85 = sadd.s32 0, 0
    %p86 = scmp.lt.s32.totalorder %s85, 0
    %s87 = scalar_select %p86, %s85, 0
    %s88 = smul.u32 6, %s87
    %p89 = scmp.lt.s32.totalorder %s88, 5
    %s90 = scalar_select %p89, %s88, 5
    %s91 = smul.addr %s90, 8
    %s92 = scalar_lea.vmem %s1, %s91
    %s93 = sadd.s32 0, 0
    %p94 = scmp.lt.s32.totalorder %s93, 0
    %s95 = scalar_select %p94, %s93, 0
    %s96 = smul.u32 6, %s95
    %s97 = sadd.s32 0, 0
    %p98 = scmp.lt.s32.totalorder %s97, 0
    %s99 = scalar_select %p98, %s97, 0
    %s100 = smul.u32 6, %s99
    %p101 = scmp.lt.s32.totalorder %s100, 5
    %s102 = scalar_select %p101, %s100, 5
    %s103 = smul.addr %s102, 8
    %s104 = scalar_lea.vmem %s2, %s103
    %s105 = sadd.s32 0, 0
    %p106 = scmp.lt.s32.totalorder %s105, 0
    %s107 = scalar_select %p106, %s105, 0
    %s108 = smul.u32 6, %s107
    %p109 = scmp.eq.s32.totalorder 0, 0
    // Predicated region
    $region22: #{tpu_custom_call.1} parent=1 // pred_check
      %p110 = pneg %p109
    $region23: #{tpu_custom_call.1} parent=1 // pred_check_branch
      %112 = sbr.rel (%p110) target = $region25
    $region24: #{tpu_custom_call.1} parent=1 // pred_region
      %vm113 = vcmask 7168
      %114 = vst.msk [vmem:[%s4] sm:$0xff] %vm113, 0.0
      %115 = vst.msk [vmem:[%s4 + $0x8] sm:$0xff] %vm113, 0.0
      %116 = vst.msk [vmem:[%s4 + $0x10] sm:$0xff] %vm113, 0.0
      %117 = vst.msk [vmem:[%s4 + $0x18] sm:$0xff] %vm113, 0.0
      %118 = vst.msk [vmem:[%s4 + $0x20] sm:$0xff] %vm113, 0.0
      %119 = vst.msk [vmem:[%s4 + $0x28] sm:$0xff] %vm113, 0.0
      %120 = vst.msk [vmem:[%s5] sm:$0xff] %vm113, 0.0
      %121 = vst.msk [vmem:[%s5 + $0x8] sm:$0xff] %vm113, 0.0
      %122 = vst.msk [vmem:[%s5 + $0x10] sm:$0xff] %vm113, 0.0
      %123 = vst.msk [vmem:[%s5 + $0x18] sm:$0xff] %vm113, 0.0
      %124 = vst.msk [vmem:[%s5 + $0x20] sm:$0xff] %vm113, 0.0
      %125 = vst.msk [vmem:[%s5 + $0x28] sm:$0xff] %vm113, 0.0
      %126 = vst.msk [vmem:[%s6] sm:$0xff] %vm113, 0.0
      %127 = vst.msk [vmem:[%s6 + $0x8] sm:$0xff] %vm113, 0.0
      %128 = vst.msk [vmem:[%s6 + $0x10] sm:$0xff] %vm113, 0.0
      %129 = vst.msk [vmem:[%s6 + $0x18] sm:$0xff] %vm113, 0.0
      %130 = vst.msk [vmem:[%s6 + $0x20] sm:$0xff] %vm113, 0.0
      %131 = vst.msk [vmem:[%s6 + $0x28] sm:$0xff] %vm113, 0.0
    $region25: #{tpu_custom_call.1} parent=1 // pred_fallthru
      _
    %s132 = sadd.s32 0, 0
    %s133 = smul.u32 %s132, 48
    %v134 = vlaneseq
    %v135 = vshrl.u32 %v134, 7
    %v136 = vadd.s32 %v135, 8
    %v137 = vadd.s32 %v135, 16
    %v138 = vadd.s32 %v135, 24
    %v139 = vadd.s32 %v135, 32
    %v140 = vadd.s32 %v135, 40
    %v141 = vstv %s133
    %v142 = vadd.s32 %v141, %v135
    %v143 = vadd.s32 %v141, %v136
    %v144 = vadd.s32 %v141, %v137
    %v145 = vadd.s32 %v141, %v138
    %v146 = vadd.s32 %v141, %v139
    %v147 = vadd.s32 %v141, %v140
    %vm148 = vcmp.lt.s32.totalorder %v142, 48
    %vm149 = vcmp.lt.s32.totalorder %v143, 48
    %vm150 = vcmp.lt.s32.totalorder %v144, 48
    %vm151 = vcmp.lt.s32.totalorder %v145, 48
    %vm152 = vcmp.lt.s32.totalorder %v146, 48
    %vm153 = vcmp.lt.s32.totalorder %v147, 48
    %v154 = vld [vmem:[#allocation2] sm:$0xff]
    %v155 = vld [vmem:[#allocation2 + $0x8] sm:$0xff]
    %v156 = vld [vmem:[#allocation2 + $0x10] sm:$0xff]
    %v157 = vld [vmem:[#allocation2 + $0x18] sm:$0xff]
    %v158 = vld [vmem:[#allocation2 + $0x20] sm:$0xff]
    %v159 = vld [vmem:[#allocation2 + $0x28] sm:$0xff]
    %v160 = vld [vmem:[#allocation2 + $0x30] sm:$0xff]
    %v161 = vld [vmem:[#allocation2 + $0x38] sm:$0xff]
    %v162 = vld [vmem:[#allocation2 + $0x40] sm:$0xff]
    %v163 = vld [vmem:[#allocation2 + $0x48] sm:$0xff]
    %v164 = vld [vmem:[#allocation2 + $0x50] sm:$0xff]
    %v165 = vld [vmem:[#allocation2 + $0x58] sm:$0xff]
    %v166 = vld [vmem:[#allocation2 + $0x60] sm:$0xff]
    %v167 = vld [vmem:[#allocation2 + $0x68] sm:$0xff]
    %v168 = vld [vmem:[#allocation2 + $0x70] sm:$0xff]
    %v169 = vld [vmem:[#allocation2 + $0x78] sm:$0xff]
    %v170 = vld [vmem:[#allocation2 + $0x80] sm:$0xff]
    %v171 = vld [vmem:[#allocation2 + $0x88] sm:$0xff]
    %v172 = vld [vmem:[#allocation2 + $0x90] sm:$0xff]
    %v173 = vld [vmem:[#allocation2 + $0x98] sm:$0xff]
    %v174 = vld [vmem:[#allocation2 + $0xa0] sm:$0xff]
    %v175 = vld [vmem:[#allocation2 + $0xa8] sm:$0xff]
    %v176 = vld [vmem:[#allocation2 + $0xb0] sm:$0xff]
    %v177 = vld [vmem:[#allocation2 + $0xb8] sm:$0xff]
    %v178 = vld [vmem:[%s92] sm:$0xff]
    %v179 = vld [vmem:[%s92 + $0x8] sm:$0xff]
    %v180 = vld [vmem:[%s92 + $0x10] sm:$0xff]
    %v181 = vld [vmem:[%s92 + $0x18] sm:$0xff]
    %v182 = vld [vmem:[%s92 + $0x20] sm:$0xff]
    %v183 = vld [vmem:[%s92 + $0x28] sm:$0xff]
    %v184 = vld [vmem:[%s104] sm:$0xff]
    %v185 = vld [vmem:[%s104 + $0x8] sm:$0xff]
    %v186 = vld [vmem:[%s104 + $0x10] sm:$0xff]
    %v187 = vld [vmem:[%s104 + $0x18] sm:$0xff]
    %v188 = vld [vmem:[%s104 + $0x20] sm:$0xff]
    %v189 = vld [vmem:[%s104 + $0x28] sm:$0xff]
    %v190 = vsel %vm148, %v184, 0.0
    %v191 = vsel %vm149, %v185, 0.0
    %v192 = vsel %vm150, %v186, 0.0
    %v193 = vsel %vm151, %v187, 0.0
    %v194 = vsel %vm152, %v188, 0.0
    %v195 = vsel %vm153, %v189, 0.0
    %v196 = vld [vmem:[%s3] sm:$0xf]
    %v197 = vlaneseq
    %v198 = vshrl.u32 %v197, 7
    %v199 = vsub.s32 0, %v198
    %v200 = vrot.slane %v196, %v199
    %v201 = vlaneseq
    %v202 = vshrl.u32 %v201, 7
    %v203 = vsub.s32 1, %v202
    %v204 = vrot.slane %v196, %v203
    %v205 = vlaneseq
    %v206 = vshrl.u32 %v205, 7
    %v207 = vsub.s32 2, %v206
    %v208 = vrot.slane %v196, %v207
    %v209 = vlaneseq
    %v210 = vshrl.u32 %v209, 7
    %v211 = vsub.s32 3, %v210
    %v212 = vrot.slane %v196, %v211
    %213 = vset.pattern.permute.xlu0 0
    %214 = vperm.xlu0 %213, %v178
    %v215 = vpop.permute.xlu0 %214
    %216 = vset.pattern.permute.xlu0 0
    %217 = vperm.xlu0 %216, %v179
    %v218 = vpop.permute.xlu0 %217
    %219 = vset.pattern.permute.xlu0 0
    %220 = vperm.xlu0 %219, %v180
    %v221 = vpop.permute.xlu0 %220
    %222 = vset.pattern.permute.xlu0 0
    %223 = vperm.xlu0 %222, %v181
    %v224 = vpop.permute.xlu0 %223
    %225 = vset.pattern.permute.xlu0 0
    %226 = vperm.xlu0 %225, %v182
    %v227 = vpop.permute.xlu0 %226
    %228 = vset.pattern.permute.xlu0 0
    %229 = vperm.xlu0 %228, %v183
    %v230 = vpop.permute.xlu0 %229
    %vm231 = vcmp.eq.s32.totalorder %v200, %v215
    %vm232 = vcmp.eq.s32.totalorder %v204, %v215
    %vm233 = vcmp.eq.s32.totalorder %v208, %v215
    %vm234 = vcmp.eq.s32.totalorder %v212, %v215
    %vm235 = vcmp.eq.s32.totalorder %v200, %v218
    %vm236 = vcmp.eq.s32.totalorder %v204, %v218
    %vm237 = vcmp.eq.s32.totalorder %v208, %v218
    %vm238 = vcmp.eq.s32.totalorder %v212, %v218
    %vm239 = vcmp.eq.s32.totalorder %v200, %v221
    %vm240 = vcmp.eq.s32.totalorder %v204, %v221
    %vm241 = vcmp.eq.s32.totalorder %v208, %v221
    %vm242 = vcmp.eq.s32.totalorder %v212, %v221
    %vm243 = vcmp.eq.s32.totalorder %v200, %v224
    %vm244 = vcmp.eq.s32.totalorder %v204, %v224
    %vm245 = vcmp.eq.s32.totalorder %v208, %v224
    %vm246 = vcmp.eq.s32.totalorder %v212, %v224
    %vm247 = vcmp.eq.s32.totalorder %v200, %v227
    %vm248 = vcmp.eq.s32.totalorder %v204, %v227
    %vm249 = vcmp.eq.s32.totalorder %v208, %v227
    %vm250 = vcmp.eq.s32.totalorder %v212, %v227
    %vm251 = vcmp.eq.s32.totalorder %v200, %v230
    %vm252 = vcmp.eq.s32.totalorder %v204, %v230
    %vm253 = vcmp.eq.s32.totalorder %v208, %v230
    %vm254 = vcmp.eq.s32.totalorder %v212, %v230
    %v255 = vsel %vm231, %v154, 0.0
    %v256 = vsel %vm232, %v155, 0.0
    %v257 = vsel %vm233, %v156, 0.0
    %v258 = vsel %vm234, %v157, 0.0
    %v259 = vsel %vm235, %v158, 0.0
    %v260 = vsel %vm236, %v159, 0.0
    %v261 = vsel %vm237, %v160, 0.0
    %v262 = vsel %vm238, %v161, 0.0
    %v263 = vsel %vm239, %v162, 0.0
    %v264 = vsel %vm240, %v163, 0.0
    %v265 = vsel %vm241, %v164, 0.0
    %v266 = vsel %vm242, %v165, 0.0
    %v267 = vsel %vm243, %v166, 0.0
    %v268 = vsel %vm244, %v167, 0.0
    %v269 = vsel %vm245, %v168, 0.0
    %v270 = vsel %vm246, %v169, 0.0
    %v271 = vsel %vm247, %v170, 0.0
    %v272 = vsel %vm248, %v171, 0.0
    %v273 = vsel %vm249, %v172, 0.0
    %v274 = vsel %vm250, %v173, 0.0
    %v275 = vsel %vm251, %v174, 0.0
    %v276 = vsel %vm252, %v175, 0.0
    %v277 = vsel %vm253, %v176, 0.0
    %v278 = vsel %vm254, %v177, 0.0
    %v279 = vadd.f32 %v255, %v256
    %v280 = vadd.f32 %v279, %v257
    %v281 = vadd.f32 %v280, %v258
    %282 = vadd.xlane.f32.xlu0 %v281
    %v283 = vpop.xlane.xlu0 %282
    %v284 = vadd.f32 %v259, %v260
    %v285 = vadd.f32 %v284, %v261
    %v286 = vadd.f32 %v285, %v262
    %287 = vadd.xlane.f32.xlu0 %v286
    %v288 = vpop.xlane.xlu0 %287
    %v289 = vadd.f32 %v263, %v264
    %v290 = vadd.f32 %v289, %v265
    %v291 = vadd.f32 %v290, %v266
    %292 = vadd.xlane.f32.xlu0 %v291
    %v293 = vpop.xlane.xlu0 %292
    %v294 = vadd.f32 %v267, %v268
    %v295 = vadd.f32 %v294, %v269
    %v296 = vadd.f32 %v295, %v270
    %297 = vadd.xlane.f32.xlu0 %v296
    %v298 = vpop.xlane.xlu0 %297
    %v299 = vadd.f32 %v271, %v272
    %v300 = vadd.f32 %v299, %v273
    %v301 = vadd.f32 %v300, %v274
    %302 = vadd.xlane.f32.xlu0 %v301
    %v303 = vpop.xlane.xlu0 %302
    %v304 = vadd.f32 %v275, %v276
    %v305 = vadd.f32 %v304, %v277
    %v306 = vadd.f32 %v305, %v278
    %307 = vadd.xlane.f32.xlu0 %v306
    %v308 = vpop.xlane.xlu0 %307
    %v309 = vsel %vm148, %v283, 0.0
    %v310 = vsel %vm149, %v288, 0.0
    %v311 = vsel %vm150, %v293, 0.0
    %v312 = vsel %vm151, %v298, 0.0
    %v313 = vsel %vm152, %v303, 0.0
    %v314 = vsel %vm153, %v308, 0.0
    %v315 = vld [vmem:[%s4] sm:$0xff]
    %v316 = vld [vmem:[%s4 + $0x8] sm:$0xff]
    %v317 = vld [vmem:[%s4 + $0x10] sm:$0xff]
    %v318 = vld [vmem:[%s4 + $0x18] sm:$0xff]
    %v319 = vld [vmem:[%s4 + $0x20] sm:$0xff]
    %v320 = vld [vmem:[%s4 + $0x28] sm:$0xff]
    %v321 = vsub.f32 0.0, %v309
    %v322 = vsub.f32 0.0, %v310
    %v323 = vsub.f32 0.0, %v311
    %v324 = vsub.f32 0.0, %v312
    %v325 = vsub.f32 0.0, %v313
    %v326 = vsub.f32 0.0, %v314
    %v327 = vmul.f32 %v321, %v190
    %v328 = vmul.f32 %v322, %v191
    %v329 = vmul.f32 %v323, %v192
    %v330 = vmul.f32 %v324, %v193
    %v331 = vmul.f32 %v325, %v194
    %v332 = vmul.f32 %v326, %v195
    %v333 = vadd.f32 %v315, %v327
    %v334 = vadd.f32 %v316, %v328
    %v335 = vadd.f32 %v317, %v329
    %v336 = vadd.f32 %v318, %v330
    %v337 = vadd.f32 %v319, %v331
    %v338 = vadd.f32 %v320, %v332
    %vm339 = vcmask 7168
    %340 = vst.msk [vmem:[%s4] sm:$0xff] %vm339, %v333
    %341 = vst.msk [vmem:[%s4 + $0x8] sm:$0xff] %vm339, %v334
    %342 = vst.msk [vmem:[%s4 + $0x10] sm:$0xff] %vm339, %v335
    %343 = vst.msk [vmem:[%s4 + $0x18] sm:$0xff] %vm339, %v336
    %344 = vst.msk [vmem:[%s4 + $0x20] sm:$0xff] %vm339, %v337
    %345 = vst.msk [vmem:[%s4 + $0x28] sm:$0xff] %vm339, %v338
    %v346 = vld [vmem:[%s5] sm:$0xff]
    %v347 = vld [vmem:[%s5 + $0x8] sm:$0xff]
    %v348 = vld [vmem:[%s5 + $0x10] sm:$0xff]
    %v349 = vld [vmem:[%s5 + $0x18] sm:$0xff]
    %v350 = vld [vmem:[%s5 + $0x20] sm:$0xff]
    %v351 = vld [vmem:[%s5 + $0x28] sm:$0xff]
    %v352 = vadd.f32 %v346, %v190
    %v353 = vadd.f32 %v347, %v191
    %v354 = vadd.f32 %v348, %v192
    %v355 = vadd.f32 %v349, %v193
    %v356 = vadd.f32 %v350, %v194
    %v357 = vadd.f32 %v351, %v195
    %358 = vst.msk [vmem:[%s5] sm:$0xff] %vm339, %v352
    %359 = vst.msk [vmem:[%s5 + $0x8] sm:$0xff] %vm339, %v353
    %360 = vst.msk [vmem:[%s5 + $0x10] sm:$0xff] %vm339, %v354
    %361 = vst.msk [vmem:[%s5 + $0x18] sm:$0xff] %vm339, %v355
    %362 = vst.msk [vmem:[%s5 + $0x20] sm:$0xff] %vm339, %v356
    %363 = vst.msk [vmem:[%s5 + $0x28] sm:$0xff] %vm339, %v357
    %v364 = vmul.f32 %v154, 1.442695
    %v365 = vpow.pop %v364
    %v366 = vmul.f32 %v155, 1.442695
    %v367 = vpow.pop %v366
    %v368 = vmul.f32 %v156, 1.442695
    %v369 = vpow.pop %v368
    %v370 = vmul.f32 %v157, 1.442695
    %v371 = vpow.pop %v370
    %v372 = vmul.f32 %v158, 1.442695
    %v373 = vpow.pop %v372
    %v374 = vmul.f32 %v159, 1.442695
    %v375 = vpow.pop %v374
    %v376 = vmul.f32 %v160, 1.442695
    %v377 = vpow.pop %v376
    %v378 = vmul.f32 %v161, 1.442695
    %v379 = vpow.pop %v378
    %v380 = vmul.f32 %v162, 1.442695
    %v381 = vpow.pop %v380
    %v382 = vmul.f32 %v163, 1.442695
    %v383 = vpow.pop %v382
    %v384 = vmul.f32 %v164, 1.442695
    %v385 = vpow.pop %v384
    %v386 = vmul.f32 %v165, 1.442695
    %v387 = vpow.pop %v386
    %v388 = vmul.f32 %v166, 1.442695
    %v389 = vpow.pop %v388
    %v390 = vmul.f32 %v167, 1.442695
    %v391 = vpow.pop %v390
    %v392 = vmul.f32 %v168, 1.442695
    %v393 = vpow.pop %v392
    %v394 = vmul.f32 %v169, 1.442695
    %v395 = vpow.pop %v394
    %v396 = vmul.f32 %v170, 1.442695
    %v397 = vpow.pop %v396
    %v398 = vmul.f32 %v171, 1.442695
    %v399 = vpow.pop %v398
    %v400 = vmul.f32 %v172, 1.442695
    %v401 = vpow.pop %v400
    %v402 = vmul.f32 %v173, 1.442695
    %v403 = vpow.pop %v402
    %v404 = vmul.f32 %v174, 1.442695
    %v405 = vpow.pop %v404
    %v406 = vmul.f32 %v175, 1.442695
    %v407 = vpow.pop %v406
    %v408 = vmul.f32 %v176, 1.442695
    %v409 = vpow.pop %v408
    %v410 = vmul.f32 %v177, 1.442695
    %v411 = vpow.pop %v410
    %v412 = vmul.f32 %v365, %v154
    %v413 = vmul.f32 %v367, %v155
    %v414 = vmul.f32 %v369, %v156
    %v415 = vmul.f32 %v371, %v157
    %v416 = vmul.f32 %v373, %v158
    %v417 = vmul.f32 %v375, %v159
    %v418 = vmul.f32 %v377, %v160
    %v419 = vmul.f32 %v379, %v161
    %v420 = vmul.f32 %v381, %v162
    %v421 = vmul.f32 %v383, %v163
    %v422 = vmul.f32 %v385, %v164
    %v423 = vmul.f32 %v387, %v165
    %v424 = vmul.f32 %v389, %v166
    %v425 = vmul.f32 %v391, %v167
    %v426 = vmul.f32 %v393, %v168
    %v427 = vmul.f32 %v395, %v169
    %v428 = vmul.f32 %v397, %v170
    %v429 = vmul.f32 %v399, %v171
    %v430 = vmul.f32 %v401, %v172
    %v431 = vmul.f32 %v403, %v173
    %v432 = vmul.f32 %v405, %v174
    %v433 = vmul.f32 %v407, %v175
    %v434 = vmul.f32 %v409, %v176
    %v435 = vmul.f32 %v411, %v177
    %v436 = vadd.f32 %v412, %v413
    %v437 = vadd.f32 %v436, %v414
    %v438 = vadd.f32 %v437, %v415
    %439 = vadd.xlane.f32.xlu0 %v438
    %v440 = vpop.xlane.xlu0 %439
    %v441 = vadd.f32 %v416, %v417
    %v442 = vadd.f32 %v441, %v418
    %v443 = vadd.f32 %v442, %v419
    %444 = vadd.xlane.f32.xlu0 %v443
    %v445 = vpop.xlane.xlu0 %444
    %v446 = vadd.f32 %v420, %v421
    %v447 = vadd.f32 %v446, %v422
    %v448 = vadd.f32 %v447, %v423
    %449 = vadd.xlane.f32.xlu0 %v448
    %v450 = vpop.xlane.xlu0 %449
    %v451 = vadd.f32 %v424, %v425
    %v452 = vadd.f32 %v451, %v426
    %v453 = vadd.f32 %v452, %v427
    %454 = vadd.xlane.f32.xlu0 %v453
    %v455 = vpop.xlane.xlu0 %454
    %v456 = vadd.f32 %v428, %v429
    %v457 = vadd.f32 %v456, %v430
    %v458 = vadd.f32 %v457, %v431
    %459 = vadd.xlane.f32.xlu0 %v458
    %v460 = vpop.xlane.xlu0 %459
    %v461 = vadd.f32 %v432, %v433
    %v462 = vadd.f32 %v461, %v434
    %v463 = vadd.f32 %v462, %v435
    %464 = vadd.xlane.f32.xlu0 %v463
    %v465 = vpop.xlane.xlu0 %464
    %v466 = vsel %vm148, %v440, 0.0
    %v467 = vsel %vm149, %v445, 0.0
    %v468 = vsel %vm150, %v450, 0.0
    %v469 = vsel %vm151, %v455, 0.0
    %v470 = vsel %vm152, %v460, 0.0
    %v471 = vsel %vm153, %v465, 0.0
    %v472 = vld [vmem:[%s6] sm:$0xff]
    %v473 = vld [vmem:[%s6 + $0x8] sm:$0xff]
    %v474 = vld [vmem:[%s6 + $0x10] sm:$0xff]
    %v475 = vld [vmem:[%s6 + $0x18] sm:$0xff]
    %v476 = vld [vmem:[%s6 + $0x20] sm:$0xff]
    %v477 = vld [vmem:[%s6 + $0x28] sm:$0xff]
    %v478 = vsub.f32 0.0, %v466
    %v479 = vsub.f32 0.0, %v467
    %v480 = vsub.f32 0.0, %v468
    %v481 = vsub.f32 0.0, %v469
    %v482 = vsub.f32 0.0, %v470
    %v483 = vsub.f32 0.0, %v471
    %v484 = vmul.f32 %v478, %v190
    %v485 = vmul.f32 %v479, %v191
    %v486 = vmul.f32 %v480, %v192
    %v487 = vmul.f32 %v481, %v193
    %v488 = vmul.f32 %v482, %v194
    %v489 = vmul.f32 %v483, %v195
    %v490 = vadd.f32 %v472, %v484
    %v491 = vadd.f32 %v473, %v485
    %v492 = vadd.f32 %v474, %v486
    %v493 = vadd.f32 %v475, %v487
    %v494 = vadd.f32 %v476, %v488
    %v495 = vadd.f32 %v477, %v489
    %496 = vst.msk [vmem:[%s6] sm:$0xff] %vm339, %v490
    %497 = vst.msk [vmem:[%s6 + $0x8] sm:$0xff] %vm339, %v491
    %498 = vst.msk [vmem:[%s6 + $0x10] sm:$0xff] %vm339, %v492
    %499 = vst.msk [vmem:[%s6 + $0x18] sm:$0xff] %vm339, %v493
    %500 = vst.msk [vmem:[%s6 + $0x20] sm:$0xff] %vm339, %v494
    %501 = vst.msk [vmem:[%s6 + $0x28] sm:$0xff] %vm339, %v495
    // Predicated region
    $region26: #{tpu_custom_call.1} parent=1 // pred_check
      _
    $region27: #{tpu_custom_call.1} parent=1 // pred_check_branch
      %503 = sbr.rel (0) target = $region29
    $region28: #{tpu_custom_call.1} parent=1 // pred_region
      _
    $region29: #{tpu_custom_call.1} parent=1 // pred_fallthru
      _
    // Predicated region
    $region30: #{tpu_custom_call.1} parent=1 // pred_check
      _
    $region31: #{tpu_custom_call.1} parent=1 // pred_check_branch
      %505 = sbr.rel (0) target = $region33
    $region32: #{tpu_custom_call.1} parent=1 // pred_region
      _
    $region33: #{tpu_custom_call.1} parent=1 // pred_fallthru
      _
    // Predicated region
    $region34: #{tpu_custom_call.1} parent=1 // pred_check
      _
    $region35: #{tpu_custom_call.1} parent=1 // pred_check_branch
      %507 = sbr.rel (0) target = $region37
    $region36: #{tpu_custom_call.1} parent=1 // pred_region
      _
    $region37: #{tpu_custom_call.1} parent=1 // pred_fallthru
      _
    // Predicated region
    $region38: #{tpu_custom_call.1} parent=1 // pred_check
      _
    $region39: #{tpu_custom_call.1} parent=1 // pred_check_branch
      %509 = sbr.rel (0) target = $region41
    $region40: #{tpu_custom_call.1} parent=1 // pred_region
      _
    $region41: #{tpu_custom_call.1} parent=1 // pred_fallthru
      _
    // Predicated region
    $region42: #{tpu_custom_call.1} parent=1 // pred_check
      _
    $region43: #{tpu_custom_call.1} parent=1 // pred_check_branch
      %511 = sbr.rel (0) target = $region45
    $region44: #{tpu_custom_call.1} parent=1 // pred_region
      _
    $region45: #{tpu_custom_call.1} parent=1 // pred_fallthru
      _
    // Predicated region
    $region46: #{tpu_custom_call.1} parent=1 // pred_check
      _
    $region47: #{tpu_custom_call.1} parent=1 // pred_check_branch
      %513 = sbr.rel (0) target = $region49
    $region48: #{tpu_custom_call.1} parent=1 // pred_region
      _
    $region49: #{tpu_custom_call.1} parent=1 // pred_fallthru
      _
    %514 = vsyncpa [#allocation3], 1

</llo_original>
